<compile_context>
chip_gen: v7x
topology: tpu7x:2x2x1
jax: 0.10.0
libtpu: 0.0.40
codegen_flags: <defaults>
</compile_context>

<pallas_src>
import jax
import jax.numpy as jnp
from jax.experimental import pallas as pl
from jax.experimental.pallas import tpu as pltpu


# ------------------------------ Pallas kernel -------------------------------

def _ffn_kernel(x_ref, w1_ref, b1_ref, w2_ref, b2_ref, o_ref, acc_ref):
    """Fused  y = relu(x @ w1 + b1) @ w2 + b2  over one (row, d_ff) tile.

    Grid axis 0: independent row tiles (parallel).
    Grid axis 1: reduction over d_ff; partial products accumulate into the
    resident f32 scratch `acc_ref`, output written on the last step.
    """
    f = pl.program_id(1)

    @pl.when(f == 0)
    def _():
        acc_ref[...] = jnp.zeros_like(acc_ref)

    # MXU takes bf16 inputs (2x throughput on v6e/v7x, halves weight traffic);
    # accumulate in f32. Bias + ReLU in f32 on the VPU (v5e has no bf16 VPU).
    h = jnp.dot(x_ref[...].astype(jnp.bfloat16), w1_ref[...],
                preferred_element_type=jnp.float32) + b1_ref[...]
    h = jnp.maximum(h, 0.0)                      # act='relu'
    # TODO(synk): nn.Dropout is identity in the eval-mode forward pass.
    acc_ref[...] += jnp.dot(h.astype(jnp.bfloat16), w2_ref[...],
                            preferred_element_type=jnp.float32)

    @pl.when(f == pl.num_programs(1) - 1)
    def _():
        o_ref[...] = (acc_ref[...] + b2_ref[...]).astype(o_ref.dtype)


# -------------------------------- wrapper ------------------------------------

def positionwise_feed_forward(x, w1, b1, w2, b2, *, tm=None, tf=None):
    """PositionwiseFeedForward.forward.

    x : (..., d_model)
    w1: (d_model, d_ff),  b1: (d_ff,)
    w2: (d_ff, d_model),  b2: (d_model,)
    """
    *lead, d_model = x.shape
    d_ff = w1.shape[1]
    M = 1
    for d in lead:
        M *= d
    x2 = x.reshape(M, d_model)

    # Row tile: one big tile if it fits, otherwise 256-row tiles
    # (per feedback: tm=8 was pure per-grid-step overhead).
    if tm is None:
        tm = M if M <= 256 else 256
    assert M % tm == 0 and (tm == M or tm % 8 == 0)

    # Hidden-dim (reduction) tile: caps per-step weight blocks so the kernel
    # also works at real ViT sizes without exceeding the scoped VMEM limit.
    if tf is None:
        tf = d_ff if d_ff <= 512 else 512
    assert d_ff % tf == 0 and (tf == d_ff or tf % 128 == 0)

    w1 = w1.astype(jnp.bfloat16)
    w2 = w2.astype(jnp.bfloat16)
    b1 = b1.reshape(1, d_ff).astype(jnp.float32)
    b2 = b2.reshape(1, d_model).astype(jnp.float32)

    out = pl.pallas_call(
        _ffn_kernel,
        out_shape=jax.ShapeDtypeStruct((M, d_model), x.dtype),
        grid=(M // tm, d_ff // tf),
        in_specs=[
            pl.BlockSpec((tm, d_model), lambda i, f: (i, 0)),   # x rows
            pl.BlockSpec((d_model, tf), lambda i, f: (0, f)),   # w1 slice
            pl.BlockSpec((1, tf),       lambda i, f: (0, f)),   # b1 slice
            pl.BlockSpec((tf, d_model), lambda i, f: (f, 0)),   # w2 slice
            pl.BlockSpec((1, d_model),  lambda i, f: (0, 0)),   # b2
        ],
        out_specs=pl.BlockSpec((tm, d_model), lambda i, f: (i, 0)),
        scratch_shapes=[pltpu.VMEM((tm, d_model), jnp.float32)],
        compiler_params=pltpu.CompilerParams(
            dimension_semantics=("parallel", "arbitrary")),
    )(x2, w1, b1, w2, b2)
    return out.reshape(*lead, d_model)


# ------------------------------ reference ------------------------------------

def ffn_reference(x, w1, b1, w2, b2):
    """Pure-JAX reference with the same bf16-MXU / f32-accumulate math."""
    h = jnp.dot(x.astype(jnp.bfloat16), w1.astype(jnp.bfloat16),
                preferred_element_type=jnp.float32) + b1
    h = jnp.maximum(h, 0.0)
    y = jnp.dot(h.astype(jnp.bfloat16), w2.astype(jnp.bfloat16),
                preferred_element_type=jnp.float32) + b2
    return y.astype(x.dtype)


# --------------------------------- main ---------------------------------------

if __name__ == "__main__":
    # Small token tensor (B, S, d_model) consistent with the module's use in
    # the UNETR transformer; lane-dense (multiple-of-128) feature dims.
    B, S = 2, 16
    d_model, d_ff = 128, 256

    key = jax.random.PRNGKey(0)
    kx, k1, kb1, k2, kb2 = jax.random.split(key, 5)
    x = jax.random.normal(kx, (B, S, d_model), dtype=jnp.float32)
    w1 = 0.02 * jax.random.normal(k1, (d_model, d_ff), dtype=jnp.float32)
    b1 = 0.02 * jax.random.normal(kb1, (d_ff,), dtype=jnp.float32)
    w2 = 0.02 * jax.random.normal(k2, (d_ff, d_model), dtype=jnp.float32)
    b2 = 0.02 * jax.random.normal(kb2, (d_model,), dtype=jnp.float32)

    y = positionwise_feed_forward(x, w1, b1, w2, b2)
    y = jax.block_until_ready(y)

    y_ref = ffn_reference(x, w1, b1, w2, b2)

    assert y.shape == (B, S, d_model)
    assert bool(jnp.all(jnp.isfinite(y)))
    assert bool(jnp.allclose(y, y_ref, atol=2e-3, rtol=2e-3)), \
        float(jnp.max(jnp.abs(y - y_ref)))
    print("KERNEL_OK")
</pallas_src>

<mosaic_0001>
module attributes {stable_mosaic.version = 11 : i64} {
  func.func @_ffn_kernel(%arg0: i32, %arg1: i32, %arg2: memref<32x128xf32, #tpu.memory_space<vmem>>, %arg3: memref<128x256xbf16, #tpu.memory_space<vmem>>, %arg4: memref<1x256xf32, #tpu.memory_space<vmem>>, %arg5: memref<256x128xbf16, #tpu.memory_space<vmem>>, %arg6: memref<1x128xf32, #tpu.memory_space<vmem>>, %arg7: memref<32x128xf32, #tpu.memory_space<vmem>>, %arg8: memref<32x128xf32, #tpu.memory_space<vmem>>) attributes {dimension_semantics = [#tpu.dimension_semantics<parallel>, #tpu.dimension_semantics<arbitrary>], iteration_bounds = array<i64: 1, 1>, scalar_prefetch = 0 : i64, scratch_operands = 1 : i64, tpu.core_type = #tpu.core_type<tc>, window_params = [{transform_indices = @transform_0, window_bounds = array<i64: 32, 128>}, {transform_indices = @transform_1, window_bounds = array<i64: 128, 256>}, {transform_indices = @transform_2, window_bounds = array<i64: 1, 256>}, {transform_indices = @transform_3, window_bounds = array<i64: 256, 128>}, {pipeline_mode = #tpu.pipeline_mode<synchronous>, transform_indices = @transform_4, window_bounds = array<i64: 1, 128>}, {transform_indices = @transform_5, window_bounds = array<i64: 32, 128>}]} {
    %c0_i32 = arith.constant 0 : i32
    %0 = arith.cmpi eq, %arg1, %c0_i32 : i32
    %1 = arith.extui %0 : i1 to i32
    %c0_i32_0 = arith.constant 0 : i32
    %2 = arith.cmpi ne, %1, %c0_i32_0 : i32
    scf.if %2 {
      %cst_16 = arith.constant 0.000000e+00 : f32
      %21 = vector.broadcast %cst_16 : f32 to vector<32x128xf32>
      %c0_17 = arith.constant 0 : index
      %c0_18 = arith.constant 0 : index
      %22 = vector.load %arg8[%c0_17, %c0_18] : memref<32x128xf32, #tpu.memory_space<vmem>>, vector<32x128xf32>
      tpu.vector_store %arg8[%c0_17, %c0_18], %21 {strides = array<i32>} : memref<32x128xf32, #tpu.memory_space<vmem>>, vector<32x128xf32>,
    } else {
    }
    %c0 = arith.constant 0 : index
    %c0_1 = arith.constant 0 : index
    %3 = vector.load %arg2[%c0, %c0_1] : memref<32x128xf32, #tpu.memory_space<vmem>>, vector<32x128xf32>
    %4 = arith.truncf %3 : vector<32x128xf32> to vector<32x128xbf16>
    %c0_2 = arith.constant 0 : index
    %c0_3 = arith.constant 0 : index
    %5 = vector.load %arg3[%c0_2, %c0_3] : memref<128x256xbf16, #tpu.memory_space<vmem>>, vector<128x256xbf16>
    %cst = arith.constant dense<0.000000e+00> : vector<32x256xf32>
    %6 = tpu.matmul %4, %5, %cst {dimension_numbers = #tpu.dot_dimension_numbers<[1], [0], [0], [1], [0, 0, 1, 1], [], []>} : vector<32x128xbf16>, vector<128x256xbf16>, vector<32x256xf32> -> vector<32x256xf32>
    %c0_4 = arith.constant 0 : index
    %c0_5 = arith.constant 0 : index
    %7 = vector.load %arg4[%c0_4, %c0_5] : memref<1x256xf32, #tpu.memory_space<vmem>>, vector<1x256xf32>
    %8 = vector.broadcast %7 : vector<1x256xf32> to vector<32x256xf32>
    %9 = arith.addf %6, %8 : vector<32x256xf32>
    %cst_6 = arith.constant 0.000000e+00 : f32
    %10 = vector.broadcast %cst_6 : f32 to vector<32x256xf32>
    %11 = arith.maximumf %9, %10 : vector<32x256xf32>
    %c0_7 = arith.constant 0 : index
    %c0_8 = arith.constant 0 : index
    %12 = vector.load %arg8[%c0_7, %c0_8] : memref<32x128xf32, #tpu.memory_space<vmem>>, vector<32x128xf32>
    %13 = arith.truncf %11 : vector<32x256xf32> to vector<32x256xbf16>
    %c0_9 = arith.constant 0 : index
    %c0_10 = arith.constant 0 : index
    %14 = vector.load %arg5[%c0_9, %c0_10] : memref<256x128xbf16, #tpu.memory_space<vmem>>, vector<256x128xbf16>
    %cst_11 = arith.constant dense<0.000000e+00> : vector<32x128xf32>
    %15 = tpu.matmul %13, %14, %cst_11 {dimension_numbers = #tpu.dot_dimension_numbers<[1], [0], [0], [1], [0, 0, 1, 1], [], []>} : vector<32x256xbf16>, vector<256x128xbf16>, vector<32x128xf32> -> vector<32x128xf32>
    %16 = arith.addf %12, %15 : vector<32x128xf32>
    %c0_12 = arith.constant 0 : index
    %c0_13 = arith.constant 0 : index
    %17 = vector.load %arg8[%c0_12, %c0_13] : memref<32x128xf32, #tpu.memory_space<vmem>>, vector<32x128xf32>
    tpu.vector_store %arg8[%c0_12, %c0_13], %16 {strides = array<i32>} : memref<32x128xf32, #tpu.memory_space<vmem>>, vector<32x128xf32>,
    %c0_i32_14 = arith.constant 0 : i32
    %18 = arith.cmpi eq, %arg1, %c0_i32_14 : i32
    %19 = arith.extui %18 : i1 to i32
    %c0_i32_15 = arith.constant 0 : i32
    %20 = arith.cmpi ne, %19, %c0_i32_15 : i32
    scf.if %20 {
      %c0_16 = arith.constant 0 : index
      %c0_17 = arith.constant 0 : index
      %21 = vector.load %arg8[%c0_16, %c0_17] : memref<32x128xf32, #tpu.memory_space<vmem>>, vector<32x128xf32>
      %c0_18 = arith.constant 0 : index
      %c0_19 = arith.constant 0 : index
      %22 = vector.load %arg6[%c0_18, %c0_19] : memref<1x128xf32, #tpu.memory_space<vmem>>, vector<1x128xf32>
      %23 = vector.broadcast %22 : vector<1x128xf32> to vector<32x128xf32>
      %24 = arith.addf %21, %23 : vector<32x128xf32>
      %c0_20 = arith.constant 0 : index
      %c0_21 = arith.constant 0 : index
      %25 = vector.load %arg7[%c0_20, %c0_21] : memref<32x128xf32, #tpu.memory_space<vmem>>, vector<32x128xf32>
      tpu.vector_store %arg7[%c0_20, %c0_21], %24 {strides = array<i32>} : memref<32x128xf32, #tpu.memory_space<vmem>>, vector<32x128xf32>,
    } else {
    }
    return
  }
  func.func @transform_0(%arg0: i32, %arg1: i32) -> (i32, i32) {
    %c0_i32 = arith.constant 0 : i32
    %c0_i32_0 = arith.constant 0 : i32
    return %arg0, %c0_i32 : i32, i32
  }
  func.func @transform_1(%arg0: i32, %arg1: i32) -> (i32, i32) {
    %c0_i32 = arith.constant 0 : i32
    %c0_i32_0 = arith.constant 0 : i32
    return %c0_i32, %arg1 : i32, i32
  }
  func.func @transform_2(%arg0: i32, %arg1: i32) -> (i32, i32) {
    %c0_i32 = arith.constant 0 : i32
    %c0_i32_0 = arith.constant 0 : i32
    return %c0_i32, %arg1 : i32, i32
  }
  func.func @transform_3(%arg0: i32, %arg1: i32) -> (i32, i32) {
    %c0_i32 = arith.constant 0 : i32
    %c0_i32_0 = arith.constant 0 : i32
    return %arg1, %c0_i32 : i32, i32
  }
  func.func @transform_4(%arg0: i32, %arg1: i32) -> (i32, i32) {
    %c0_i32 = arith.constant 0 : i32
    %c0_i32_0 = arith.constant 0 : i32
    %c0_i32_1 = arith.constant 0 : i32
    return %c0_i32, %c0_i32_0 : i32, i32
  }
  func.func @transform_5(%arg0: i32, %arg1: i32) -> (i32, i32) {
    %c0_i32 = arith.constant 0 : i32
    %c0_i32_0 = arith.constant 0 : i32
    return %arg0, %c0_i32 : i32, i32
  }
}

</mosaic_0001>

<llo_original>
// kernel: tpu_custom_call.1
$region0: #{tpu_custom_call.1}
  #allocation0 [shape = 'u32[]', space=smem, size = 0x4, offset = 0x4, fixed_abs, tag = 'smem constant byte address 0x4 - core index']
  #allocation1 [shape = 'u32[144,128]{1,0:T(1,128)}', space=vmem, size = 0x12000, scoped, tag = 'internal scratch']
  #allocation2 [shape = 'f32[32,128]{1,0:T(8,128)}', space=vmem, size = 0x4000, scoped, tag = 'scratch operand']
  %s0 = inlined_call_operand.hbm [shape: f32[32,128], index: 0, kind: input, shape index: {}]
  %s1 = inlined_call_operand.hbm [shape: bf16[128,256], index: 1, kind: input, shape index: {}]
  %s2 = inlined_call_operand.vmem [shape: f32[1,256], index: 2, kind: input, shape index: {}]
  %s3 = inlined_call_operand.hbm [shape: bf16[256,128], index: 3, kind: input, shape index: {}]
  %s4 = inlined_call_operand.vmem [shape: f32[1,128], index: 4, kind: input, shape index: {}]
  %s5 = inlined_call_operand.hbm [shape: f32[32,128], index: 5, kind: output, shape index: {}]
  %s6 = sld [smem:[#allocation0]]
  $region50: #{tpu_custom_call.1} parent=0
    _
  %s8 = ssub.s32 1, %s6
  %s9 = scalar_select 0, %s8, %s6
  $region1: #{tpu_custom_call.1} parent=0
    #allocation3 [shape = 'u8[16384]{0}', space=vmem, size = 0x4000, scoped, tag = 'input window, operand 0, single buffered']
    #allocation4 [shape = 's32[1]{0}', space=sflag, size = 0x4, scoped, tag = 'scoped memory for tpu_custom_call.1']
    #allocation5 [shape = 's32[1]{0}', space=sflag, size = 0x4, scoped, tag = 'scoped memory for tpu_custom_call.1']
    #allocation6 [shape = 'u8[65536]{0}', space=vmem, size = 0x10000, scoped, tag = 'input window, operand 1, single buffered']
    #allocation7 [shape = 's32[1]{0}', space=sflag, size = 0x4, scoped, tag = 'scoped memory for tpu_custom_call.1']
    #allocation8 [shape = 'u8[65536]{0}', space=vmem, size = 0x10000, scoped, tag = 'input window, operand 3, single buffered']
    #allocation9 [shape = 'u8[16384]{0}', space=vmem, size = 0x4000, scoped, tag = 'output window, operand 0, single buffered']
    %10 = vsyncpa [#allocation4], 0
    %11 = vsyncpa [#allocation7], 0
    %12 = vsyncpa [#allocation5], 0
    // Predicated region
    $region2: #{tpu_custom_call.1} parent=1 // pred_check
      _
    $region3: #{tpu_custom_call.1} parent=1 // pred_check_branch
      %14 = sbr.rel (0) target = $region5
    $region4: #{tpu_custom_call.1} parent=1 // pred_region
      %s16 = ssub.s32 512, 512
      %17 = vsyncadd [#allocation4], %s16
      %s18 = sshll.u32 [#allocation3], 4
      %s19 = int_to_ptr.vmem [resolvable:$true] %s18
      %24 = dma.hbm_to_vmem [thread:$0]  %s0, 512, %s19, [#allocation4], 128, 128, 8
    $region5: #{tpu_custom_call.1} parent=1 // pred_fallthru
      _
    // Predicated region
    $region6: #{tpu_custom_call.1} parent=1 // pred_check
      _
    $region7: #{tpu_custom_call.1} parent=1 // pred_check_branch
      %26 = sbr.rel (0) target = $region9
    $region8: #{tpu_custom_call.1} parent=1 // pred_region
      %s28 = ssub.s32 2048, 2048
      %29 = vsyncadd [#allocation7], %s28
      %s30 = sshll.u32 [#allocation6], 4
      %s31 = int_to_ptr.vmem [resolvable:$true] %s30
      %36 = dma.hbm_to_vmem [thread:$0]  %s1, 2048, %s31, [#allocation7], 128, 128, 8
    $region9: #{tpu_custom_call.1} parent=1 // pred_fallthru
      _
    // Predicated region
    $region10: #{tpu_custom_call.1} parent=1 // pred_check
      _
    $region11: #{tpu_custom_call.1} parent=1 // pred_check_branch
      %38 = sbr.rel (0) target = $region13
    $region12: #{tpu_custom_call.1} parent=1 // pred_region
      _
    $region13: #{tpu_custom_call.1} parent=1 // pred_fallthru
      _
    // Predicated region
    $region14: #{tpu_custom_call.1} parent=1 // pred_check
      _
    $region15: #{tpu_custom_call.1} parent=1 // pred_check_branch
      %40 = sbr.rel (0) target = $region17
    $region16: #{tpu_custom_call.1} parent=1 // pred_region
      %s42 = ssub.s32 2048, 2048
      %43 = vsyncadd [#allocation7], %s42
      %s44 = sshll.u32 [#allocation8], 4
      %s45 = int_to_ptr.vmem [resolvable:$true] %s44
      %50 = dma.hbm_to_vmem [thread:$0]  %s3, 2048, %s45, [#allocation7], 64, 64, 4
    $region17: #{tpu_custom_call.1} parent=1 // pred_fallthru
      _
    // Predicated region
    $region18: #{tpu_custom_call.1} parent=1 // pred_check
      _
    $region19: #{tpu_custom_call.1} parent=1 // pred_check_branch
      %52 = sbr.rel (0) target = $region21
    $region20: #{tpu_custom_call.1} parent=1 // pred_region
      _
    $region21: #{tpu_custom_call.1} parent=1 // pred_fallthru
      _
    // Predicated region
    $region22: #{tpu_custom_call.1} parent=1 // pred_check
      _
    $region23: #{tpu_custom_call.1} parent=1 // pred_check_branch
      %54 = sbr.rel (0) target = $region25
    $region24: #{tpu_custom_call.1} parent=1 // pred_region
      %55 = dma.done [#allocation4], 512
    $region25: #{tpu_custom_call.1} parent=1 // pred_fallthru
      _
    // Predicated region
    $region26: #{tpu_custom_call.1} parent=1 // pred_check
      _
    $region27: #{tpu_custom_call.1} parent=1 // pred_check_branch
      %57 = sbr.rel (0) target = $region29
    $region28: #{tpu_custom_call.1} parent=1 // pred_region
      %58 = dma.done [#allocation7], 2048
    $region29: #{tpu_custom_call.1} parent=1 // pred_fallthru
      _
    // Predicated region
    $region30: #{tpu_custom_call.1} parent=1 // pred_check
      _
    $region31: #{tpu_custom_call.1} parent=1 // pred_check_branch
      %60 = sbr.rel (0) target = $region33
    $region32: #{tpu_custom_call.1} parent=1 // pred_region
      %61 = dma.done [#allocation7], 2048
    $region33: #{tpu_custom_call.1} parent=1 // pred_fallthru
      _
    %p63 = scmp.eq.s32.totalorder 0, 0
    // Predicated region
    $region34: #{tpu_custom_call.1} parent=1 // pred_check
      %p64 = pneg %p63
    $region35: #{tpu_custom_call.1} parent=1 // pred_check_branch
      %66 = sbr.rel (%p64) target = $region37
    $region36: #{tpu_custom_call.1} parent=1 // pred_region
      %67 = vst [vmem:[#allocation2] sm:$0xff] 0.0
      %68 = vst [vmem:[#allocation2 + $0x8] sm:$0xff] 0.0
      %69 = vst [vmem:[#allocation2 + $0x10] sm:$0xff] 0.0
      %70 = vst [vmem:[#allocation2 + $0x18] sm:$0xff] 0.0
    $region37: #{tpu_custom_call.1} parent=1 // pred_fallthru
      _
    %v71 = vld [vmem:[#allocation3] sm:$0xff]
    %v72 = vld [vmem:[#allocation3 + $0x8] sm:$0xff]
    %v73 = vld [vmem:[#allocation3 + $0x10] sm:$0xff]
    %v74 = vld [vmem:[#allocation3 + $0x18] sm:$0xff]
    %v75 = vpack.c.bf16 %v72, %v71
    %v76 = vpack.c.bf16 %v74, %v73
    %v77 = vld [vmem:[#allocation6] sm:$0xff]
    %v78 = vld [vmem:[#allocation6 + $0x8] sm:$0xff]
    %v79 = vld [vmem:[#allocation6 + $0x10] sm:$0xff]
    %v80 = vld [vmem:[#allocation6 + $0x18] sm:$0xff]
    %v81 = vld [vmem:[#allocation6 + $0x20] sm:$0xff]
    %v82 = vld [vmem:[#allocation6 + $0x28] sm:$0xff]
    %v83 = vld [vmem:[#allocation6 + $0x30] sm:$0xff]
    %v84 = vld [vmem:[#allocation6 + $0x38] sm:$0xff]
    %v85 = vld [vmem:[#allocation6 + $0x40] sm:$0xff]
    %v86 = vld [vmem:[#allocation6 + $0x48] sm:$0xff]
    %v87 = vld [vmem:[#allocation6 + $0x50] sm:$0xff]
    %v88 = vld [vmem:[#allocation6 + $0x58] sm:$0xff]
    %v89 = vld [vmem:[#allocation6 + $0x60] sm:$0xff]
    %v90 = vld [vmem:[#allocation6 + $0x68] sm:$0xff]
    %v91 = vld [vmem:[#allocation6 + $0x70] sm:$0xff]
    %v92 = vld [vmem:[#allocation6 + $0x78] sm:$0xff]
    %v93 = vld [vmem:[%s2] sm:$0x3]
    %v95 = vlaneseq
    %v96 = vshrl.u32 %v95, 7
    %v97 = vsub.s32 0, %v96
    %v98 = vrot.slane %v93, %v97
    %v99 = vlaneseq
    %v100 = vshrl.u32 %v99, 7
    %v101 = vsub.s32 1, %v100
    %v102 = vrot.slane %v93, %v101
    %v121 = vunpack.c.l.b16 %v77
    %v122 = vunpack.c.h.b16 %v77
    %v123 = vunpack.c.l.b16 %v78
    %v124 = vunpack.c.h.b16 %v78
    %v125 = vunpack.c.l.b16 %v79
    %v126 = vunpack.c.h.b16 %v79
    %v127 = vunpack.c.l.b16 %v80
    %v128 = vunpack.c.h.b16 %v80
    %v129 = vunpack.c.l.b16 %v81
    %v130 = vunpack.c.h.b16 %v81
    %v131 = vunpack.c.l.b16 %v82
    %v132 = vunpack.c.h.b16 %v82
    %v133 = vunpack.c.l.b16 %v83
    %v134 = vunpack.c.h.b16 %v83
    %v135 = vunpack.c.l.b16 %v84
    %v136 = vunpack.c.h.b16 %v84
    %v137 = vunpack.c.l.b16 %v85
    %v138 = vunpack.c.h.b16 %v85
    %v139 = vunpack.c.l.b16 %v86
    %v140 = vunpack.c.h.b16 %v86
    %v141 = vunpack.c.l.b16 %v87
    %v142 = vunpack.c.h.b16 %v87
    %v143 = vunpack.c.l.b16 %v88
    %v144 = vunpack.c.h.b16 %v88
    %v145 = vunpack.c.l.b16 %v89
    %v146 = vunpack.c.h.b16 %v89
    %v147 = vunpack.c.l.b16 %v90
    %v148 = vunpack.c.h.b16 %v90
    %v149 = vunpack.c.l.b16 %v91
    %v150 = vunpack.c.h.b16 %v91
    %v151 = vunpack.c.l.b16 %v92
    %v152 = vunpack.c.h.b16 %v92
    %v153 = vpack.c.b16 %v123, %v121
    %v154 = vpack.c.b16 %v124, %v122
    %v155 = vpack.c.b16 %v127, %v125
    %v156 = vpack.c.b16 %v128, %v126
    %v157 = vpack.c.b16 %v131, %v129
    %v158 = vpack.c.b16 %v132, %v130
    %v159 = vpack.c.b16 %v135, %v133
    %v160 = vpack.c.b16 %v136, %v134
    %v161 = vpack.c.b16 %v139, %v137
    %v162 = vpack.c.b16 %v140, %v138
    %v163 = vpack.c.b16 %v143, %v141
    %v164 = vpack.c.b16 %v144, %v142
    %v165 = vpack.c.b16 %v147, %v145
    %v166 = vpack.c.b16 %v148, %v146
    %v167 = vpack.c.b16 %v151, %v149
    %v168 = vpack.c.b16 %v152, %v150
    %185 = vmatprep.subr.bf16.mxu0 %v154
    %186 = vmatpush1.bf16.msra.mxu0 %v153
    %187 = vmatprep.subr.bf16.mxu0 %v156
    %188 = vmatpush1.bf16.msra.mxu0 %v155
    %189 = vmatprep.subr.bf16.mxu0 %v158
    %190 = vmatpush1.bf16.msra.mxu0 %v157
    %191 = vmatprep.subr.bf16.mxu0 %v160
    %192 = vmatpush1.bf16.msra.mxu0 %v159
    %193 = vmatprep.subr.bf16.mxu0 %v162
    %194 = vmatpush1.bf16.msra.mxu0 %v161
    %195 = vmatprep.subr.bf16.mxu0 %v164
    %196 = vmatpush1.bf16.msra.mxu0 %v163
    %197 = vmatprep.subr.bf16.mxu0 %v166
    %198 = vmatpush1.bf16.msra.mxu0 %v165
    %199 = vmatprep.subr.bf16.mxu0 %v168
    %200 = vmatpush1.bf16.msra.mxu0 %v167
    %201 = vmatprep.subr.bf16.mxu0 0
    %202 = vmatpush1.bf16.msra.mxu0 0
    %203 = vmatprep.subr.bf16.mxu0 0
    %204 = vmatpush1.bf16.msra.mxu0 0
    %205 = vmatprep.subr.bf16.mxu0 0
    %206 = vmatpush1.bf16.msra.mxu0 0
    %207 = vmatprep.subr.bf16.mxu0 0
    %208 = vmatpush1.bf16.msra.mxu0 0
    %209 = vmatprep.subr.bf16.mxu0 0
    %210 = vmatpush1.bf16.msra.mxu0 0
    %211 = vmatprep.subr.bf16.mxu0 0
    %212 = vmatpush1.bf16.msra.mxu0 0
    %213 = vmatprep.subr.bf16.mxu0 0
    %214 = vmatpush1.bf16.msra.mxu0 0
    %215 = vmatprep.subr.bf16.mxu0 0
    %216 = vmatpush1.bf16.msra.mxu0 0
    %217 = vmatprep.mubr.bf16.mxu0 0
    %218 = vmatmul.mubr.bf16.gmra.mrb[0].mxu0 %v75
    %v219 = vpop.f32.mrb[0].mxu0
    %v220 = vadd.f32 %v98, %v219
    %v221 = vpop.f32.mrb[0].mxu0
    %v222 = vadd.f32 %v102, %v221
    %v223 = vpop.f32.mrb[0].mxu0
    %v224 = vadd.f32 %v98, %v223
    %v225 = vpop.f32.mrb[0].mxu0
    %v226 = vadd.f32 %v102, %v225
    %227 = vmatprep.mubr.bf16.mxu0 0
    %228 = vmatmul.mubr.bf16.gmra.mrb[0].mxu0 %v76
    %v229 = vpop.f32.mrb[0].mxu0
    %v230 = vadd.f32 %v98, %v229
    %v231 = vpop.f32.mrb[0].mxu0
    %v232 = vadd.f32 %v102, %v231
    %v233 = vpop.f32.mrb[0].mxu0
    %v234 = vadd.f32 %v98, %v233
    %v235 = vpop.f32.mrb[0].mxu0
    %v236 = vadd.f32 %v102, %v235
    %237 = vdwg.mxu0
    %v238 = vmax.f32 %v220, 0.0
    %v239 = vmax.f32 %v222, 0.0
    %v240 = vmax.f32 %v224, 0.0
    %v241 = vmax.f32 %v226, 0.0
    %v242 = vmax.f32 %v230, 0.0
    %v243 = vmax.f32 %v232, 0.0
    %v244 = vmax.f32 %v234, 0.0
    %v245 = vmax.f32 %v236, 0.0
    %v246 = vld [vmem:[#allocation2] sm:$0xff]
    %v247 = vld [vmem:[#allocation2 + $0x8] sm:$0xff]
    %v248 = vld [vmem:[#allocation2 + $0x10] sm:$0xff]
    %v249 = vld [vmem:[#allocation2 + $0x18] sm:$0xff]
    %v250 = vpack.c.bf16 %v240, %v238
    %v251 = vpack.c.bf16 %v241, %v239
    %v252 = vpack.c.bf16 %v244, %v242
    %v253 = vpack.c.bf16 %v245, %v243
    %v254 = vld [vmem:[#allocation8] sm:$0xf]
    %v255 = vld [vmem:[#allocation8 + $0x4] sm:$0xf]
    %v256 = vld [vmem:[#allocation8 + $0x8] sm:$0xf]
    %v257 = vld [vmem:[#allocation8 + $0xc] sm:$0xf]
    %v258 = vld [vmem:[#allocation8 + $0x10] sm:$0xf]
    %v259 = vld [vmem:[#allocation8 + $0x14] sm:$0xf]
    %v260 = vld [vmem:[#allocation8 + $0x18] sm:$0xf]
    %v261 = vld [vmem:[#allocation8 + $0x1c] sm:$0xf]
    %v262 = vld [vmem:[#allocation8 + $0x20] sm:$0xf]
    %v263 = vld [vmem:[#allocation8 + $0x24] sm:$0xf]
    %v264 = vld [vmem:[#allocation8 + $0x28] sm:$0xf]
    %v265 = vld [vmem:[#allocation8 + $0x2c] sm:$0xf]
    %v266 = vld [vmem:[#allocation8 + $0x30] sm:$0xf]
    %v267 = vld [vmem:[#allocation8 + $0x34] sm:$0xf]
    %v268 = vld [vmem:[#allocation8 + $0x38] sm:$0xf]
    %v269 = vld [vmem:[#allocation8 + $0x3c] sm:$0xf]
    %v270 = vld [vmem:[#allocation8 + $0x40] sm:$0xf]
    %v271 = vld [vmem:[#allocation8 + $0x44] sm:$0xf]
    %v272 = vld [vmem:[#allocation8 + $0x48] sm:$0xf]
    %v273 = vld [vmem:[#allocation8 + $0x4c] sm:$0xf]
    %v274 = vld [vmem:[#allocation8 + $0x50] sm:$0xf]
    %v275 = vld [vmem:[#allocation8 + $0x54] sm:$0xf]
    %v276 = vld [vmem:[#allocation8 + $0x58] sm:$0xf]
    %v277 = vld [vmem:[#allocation8 + $0x5c] sm:$0xf]
    %v278 = vld [vmem:[#allocation8 + $0x60] sm:$0xf]
    %v279 = vld [vmem:[#allocation8 + $0x64] sm:$0xf]
    %v280 = vld [vmem:[#allocation8 + $0x68] sm:$0xf]
    %v281 = vld [vmem:[#allocation8 + $0x6c] sm:$0xf]
    %v282 = vld [vmem:[#allocation8 + $0x70] sm:$0xf]
    %v283 = vld [vmem:[#allocation8 + $0x74] sm:$0xf]
    %v284 = vld [vmem:[#allocation8 + $0x78] sm:$0xf]
    %v285 = vld [vmem:[#allocation8 + $0x7c] sm:$0xf]
    %v318 = vunpack.c.l.b16 %v254
    %v319 = vunpack.c.l.b16 %v255
    %v320 = vunpack.c.l.b16 %v256
    %v321 = vunpack.c.l.b16 %v257
    %v322 = vunpack.c.l.b16 %v258
    %v323 = vunpack.c.l.b16 %v259
    %v324 = vunpack.c.l.b16 %v260
    %v325 = vunpack.c.l.b16 %v261
    %v326 = vunpack.c.l.b16 %v262
    %v327 = vunpack.c.l.b16 %v263
    %v328 = vunpack.c.l.b16 %v264
    %v329 = vunpack.c.l.b16 %v265
    %v330 = vunpack.c.l.b16 %v266
    %v331 = vunpack.c.l.b16 %v267
    %v332 = vunpack.c.l.b16 %v268
    %v333 = vunpack.c.l.b16 %v269
    %v334 = vunpack.c.l.b16 %v270
    %v335 = vunpack.c.l.b16 %v271
    %v336 = vunpack.c.l.b16 %v272
    %v337 = vunpack.c.l.b16 %v273
    %v338 = vunpack.c.l.b16 %v274
    %v339 = vunpack.c.l.b16 %v275
    %v340 = vunpack.c.l.b16 %v276
    %v341 = vunpack.c.l.b16 %v277
    %v342 = vunpack.c.l.b16 %v278
    %v343 = vunpack.c.l.b16 %v279
    %v344 = vunpack.c.l.b16 %v280
    %v345 = vunpack.c.l.b16 %v281
    %v346 = vunpack.c.l.b16 %v282
    %v347 = vunpack.c.l.b16 %v283
    %v348 = vunpack.c.l.b16 %v284
    %v349 = vunpack.c.l.b16 %v285
    %v350 = vpack.c.b16 %v319, %v318
    %v351 = vpack.c.b16 %v321, %v320
    %v352 = vpack.c.b16 %v323, %v322
    %v353 = vpack.c.b16 %v325, %v324
    %v354 = vpack.c.b16 %v327, %v326
    %v355 = vpack.c.b16 %v329, %v328
    %v356 = vpack.c.b16 %v331, %v330
    %v357 = vpack.c.b16 %v333, %v332
    %v358 = vpack.c.b16 %v335, %v334
    %v359 = vpack.c.b16 %v337, %v336
    %v360 = vpack.c.b16 %v339, %v338
    %v361 = vpack.c.b16 %v341, %v340
    %v362 = vpack.c.b16 %v343, %v342
    %v363 = vpack.c.b16 %v345, %v344
    %v364 = vpack.c.b16 %v347, %v346
    %v365 = vpack.c.b16 %v349, %v348
    %382 = vmatprep.subr.bf16.mxu0 0
    %383 = vmatpush1.bf16.msra.mxu0 %v350
    %384 = vmatprep.subr.bf16.mxu0 0
    %385 = vmatpush1.bf16.msra.mxu0 %v351
    %386 = vmatprep.subr.bf16.mxu0 0
    %387 = vmatpush1.bf16.msra.mxu0 %v352
    %388 = vmatprep.subr.bf16.mxu0 0
    %389 = vmatpush1.bf16.msra.mxu0 %v353
    %390 = vmatprep.subr.bf16.mxu0 0
    %391 = vmatpush1.bf16.msra.mxu0 %v354
    %392 = vmatprep.subr.bf16.mxu0 0
    %393 = vmatpush1.bf16.msra.mxu0 %v355
    %394 = vmatprep.subr.bf16.mxu0 0
    %395 = vmatpush1.bf16.msra.mxu0 %v356
    %396 = vmatprep.subr.bf16.mxu0 0
    %397 = vmatpush1.bf16.msra.mxu0 %v357
    %398 = vmatprep.subr.bf16.mxu0 0
    %399 = vmatpush1.bf16.msra.mxu0 %v358
    %400 = vmatprep.subr.bf16.mxu0 0
    %401 = vmatpush1.bf16.msra.mxu0 %v359
    %402 = vmatprep.subr.bf16.mxu0 0
    %403 = vmatpush1.bf16.msra.mxu0 %v360
    %404 = vmatprep.subr.bf16.mxu0 0
    %405 = vmatpush1.bf16.msra.mxu0 %v361
    %406 = vmatprep.subr.bf16.mxu0 0
    %407 = vmatpush1.bf16.msra.mxu0 %v362
    %408 = vmatprep.subr.bf16.mxu0 0
    %409 = vmatpush1.bf16.msra.mxu0 %v363
    %410 = vmatprep.subr.bf16.mxu0 0
    %411 = vmatpush1.bf16.msra.mxu0 %v364
    %412 = vmatprep.subr.bf16.mxu0 0
    %413 = vmatpush1.bf16.msra.mxu0 %v365
    %414 = vmatprep.mubr.bf16.mxu0 %v251
    %415 = vmatmul.mubr.bf16.gmra.mrb[0].mxu0 %v250
    %v416 = vpop.f32.mrb[0].mxu0
    %v417 = vadd.f32 0.0, %v416
    %v418 = vpop.f32.mrb[0].mxu0
    %v419 = vpop.f32.mrb[0].mxu0
    %v420 = vadd.f32 0.0, %v419
    %v421 = vpop.f32.mrb[0].mxu0
    %422 = vmatprep.mubr.bf16.mxu0 %v253
    %423 = vmatmul.mubr.bf16.gmra.mrb[0].mxu0 %v252
    %v424 = vpop.f32.mrb[0].mxu0
    %v425 = vadd.f32 0.0, %v424
    %v426 = vpop.f32.mrb[0].mxu0
    %v427 = vpop.f32.mrb[0].mxu0
    %v428 = vadd.f32 0.0, %v427
    %v429 = vpop.f32.mrb[0].mxu0
    %430 = vdwg.mxu0
    %v431 = vadd.f32 %v246, %v417
    %v432 = vadd.f32 %v247, %v420
    %v433 = vadd.f32 %v248, %v425
    %v434 = vadd.f32 %v249, %v428
    %435 = vst [vmem:[#allocation2] sm:$0xff] %v431
    %436 = vst [vmem:[#allocation2 + $0x8] sm:$0xff] %v432
    %437 = vst [vmem:[#allocation2 + $0x10] sm:$0xff] %v433
    %438 = vst [vmem:[#allocation2 + $0x18] sm:$0xff] %v434
    // Predicated region
    $region38: #{tpu_custom_call.1} parent=1 // pred_check
      %p439 = pneg %p63
    $region39: #{tpu_custom_call.1} parent=1 // pred_check_branch
      %441 = sbr.rel (%p439) target = $region41
    $region40: #{tpu_custom_call.1} parent=1 // pred_region
      %v442 = vld [vmem:[#allocation2] sm:$0xff]
      %v443 = vld [vmem:[#allocation2 + $0x8] sm:$0xff]
      %v444 = vld [vmem:[#allocation2 + $0x10] sm:$0xff]
      %v445 = vld [vmem:[#allocation2 + $0x18] sm:$0xff]
      %v446 = vld [vmem:[%s4] sm:$0x1]
      %v448 = vlaneseq
      %v449 = vshrl.u32 %v448, 7
      %v450 = vsub.s32 0, %v449
      %v451 = vrot.slane %v446, %v450
      %v453 = vadd.f32 %v442, %v451
      %v454 = vadd.f32 %v443, %v451
      %v455 = vadd.f32 %v444, %v451
      %v456 = vadd.f32 %v445, %v451
      %457 = vst [vmem:[#allocation9] sm:$0xff] %v453
      %458 = vst [vmem:[#allocation9 + $0x8] sm:$0xff] %v454
      %459 = vst [vmem:[#allocation9 + $0x10] sm:$0xff] %v455
      %460 = vst [vmem:[#allocation9 + $0x18] sm:$0xff] %v456
    $region41: #{tpu_custom_call.1} parent=1 // pred_fallthru
      _
    // Predicated region
    $region42: #{tpu_custom_call.1} parent=1 // pred_check
      _
    $region43: #{tpu_custom_call.1} parent=1 // pred_check_branch
      %462 = sbr.rel (0) target = $region45
    $region44: #{tpu_custom_call.1} parent=1 // pred_region
      %s464 = ssub.s32 512, 512
      %465 = vsyncadd [#allocation5], %s464
      %s466 = sshll.u32 [#allocation9], 4
      %s467 = int_to_ptr.vmem [resolvable:$true] %s466
      %472 = dma.vmem_to_hbm [thread:$0]  %s467, 512, %s5, [#allocation5], 128, 128, 8
    $region45: #{tpu_custom_call.1} parent=1 // pred_fallthru
      _
    // Predicated region
    $region46: #{tpu_custom_call.1} parent=1 // pred_check
      _
    $region47: #{tpu_custom_call.1} parent=1 // pred_check_branch
      %474 = sbr.rel (0) target = $region49
    $region48: #{tpu_custom_call.1} parent=1 // pred_region
      %475 = dma.done [#allocation5], 512
    $region49: #{tpu_custom_call.1} parent=1 // pred_fallthru
      _
    %476 = vsyncpa [#allocation4], 1
    %477 = vsyncpa [#allocation7], 1
    %478 = vsyncpa [#allocation5], 1

</llo_original>
